<compile_context>
chip_gen: v6e
topology: v6e:2x2x1
jax: 0.10.0
libtpu: 0.0.40
codegen_flags: <defaults>
</compile_context>

<pallas_src>
import jax
import jax.numpy as jnp
from jax.experimental import pallas as pl
from jax.experimental.pallas import tpu as pltpu

EPS = 1e-5  # nn.InstanceNorm2d default eps


def _inorm_rows(h, gamma_col, beta_col):
    """InstanceNorm over the lane (HW) axis, per row (channel). Single pass.

    Note: E[x^2] - E[x]^2 can lose precision when |mean| >> std; the max(.,0)
    guard prevents NaN.  Fine for normalized activations at these magnitudes.
    """
    inv_n = 1.0 / h.shape[-1]
    s = jnp.sum(h, axis=-1, keepdims=True)
    sq = jnp.sum(h * h, axis=-1, keepdims=True)
    mu = s * inv_n
    var = jnp.maximum(sq * inv_n - mu * mu, 0.0)
    return (h - mu) * (jax.lax.rsqrt(var + EPS) * gamma_col) + beta_col


def aff_kernel(x_ref, r_ref, w1l_ref, w2l_ref, vec_ref, o_ref):
    ci = w1l_ref.shape[0]
    bb = x_ref.shape[0]
    mxu_dtype = w1l_ref.dtype

    vp = vec_ref[...]                               # (C, 4) packed params (f32)
    g1l, be1l = vp[:ci, 0:1], vp[:ci, 1:2]
    g2l, be2lg = vp[:, 2:3], vp[:, 3:4]             # be2lg = be2l + be2g (global fold)

    w1l = w1l_ref[...]                              # (ci, C)  VMEM-resident
    w2l = w2l_ref[...]                              # (C, ci)

    for b in range(bb):                             # static unroll; bb <= 8
        x = x_ref[b].astype(jnp.float32)            # (C, HW)
        res = r_ref[b].astype(jnp.float32)
        xa = x + res                                # f32 add (no bf16 VALU on v5e)

        # local branch: conv1x1 -> IN -> ReLU -> conv1x1 -> IN
        # (conv biases dropped: per-row constants are cancelled by the IN mean)
        h = jnp.dot(w1l, xa.astype(mxu_dtype), preferred_element_type=jnp.float32)
        h = jnp.maximum(_inorm_rows(h, g1l, be1l), 0.0)
        h = jnp.dot(w2l, h.astype(mxu_dtype), preferred_element_type=jnp.float32)
        xl = _inorm_rows(h, g2l, be2lg)             # global branch folded into beta

        wei = jax.nn.sigmoid(xl)
        o_ref[b] = (2.0 * (res + (x - res) * wei)).astype(o_ref.dtype)


def _choose_bb(B, C, HW, io_itemsize):
    """Images per grid step: fit a conservative VMEM budget, keep grid >= 2."""
    # Per-image per-step bytes: x/res/out double-buffered in io_dtype + f32 temps.
    per_image = 3 * 2 * C * HW * io_itemsize + 8 * C * HW * 4
    budget = 32 * 2**20      # conservative so it also fits v7x's 64 MiB physical VMEM
    max_bb = max(1, budget // per_image)
    for cand in (8, 4, 2):
        # Require grid length >= 2 so both v7x TensorCores get work.
        if cand <= max_bb and B % cand == 0 and (B // cand) >= 2:
            return cand
    return 1


def aff_forward(x_nchw, res_nchw, params, io_dtype=None):
    B, C, H, W = x_nchw.shape
    HW = H * W
    if io_dtype is None:
        io_dtype = x_nchw.dtype
    io_dtype = jnp.dtype(io_dtype)
    mxu_dtype = jnp.bfloat16 if io_dtype == jnp.dtype(jnp.bfloat16) else jnp.float32

    # (B, C, HW) is a contiguous merge of the last two NCHW dims: free reshape.
    x = x_nchw.reshape(B, C, HW).astype(io_dtype)
    r = res_nchw.reshape(B, C, HW).astype(io_dtype)

    w1l = params["w1l"].astype(mxu_dtype)   # (ci, C)  conv weight as (Cout, Cin)
    w2l = params["w2l"].astype(mxu_dtype)   # (C, ci)
    ci = w1l.shape[0]

    def pad_c(v):  # pad ci-length vectors up to C rows
        v = v.astype(jnp.float32)
        return jnp.pad(v, (0, C - v.shape[0]))

    # Packed per-channel params: [g1l, be1l, g2l, be2l + be2g].
    # b1l/b2l dropped (cancelled by IN mean); global branch constant-folds to be2g.
    vec_pack = jnp.stack(
        [pad_c(params["g1l"]), pad_c(params["be1l"]),
         params["g2l"].astype(jnp.float32),
         params["be2l"].astype(jnp.float32) + params["be2g"].astype(jnp.float32)],
        axis=1)                              # (C, 4)

    bb = _choose_bb(B, C, HW, io_dtype.itemsize)

    # Scoped-VMEM budget: io blocks double-buffered in io_dtype; in-kernel
    # temporaries are always f32 regardless of io_dtype; weights are tiny.
    w_bytes = 2 * (2 * ci * C * jnp.dtype(mxu_dtype).itemsize + C * 4 * 4)
    needed = (3 * 2 * bb * C * HW * io_dtype.itemsize
              + 8 * bb * C * HW * 4 + w_bytes + (1 << 20))
    vmem_limit = int(min(40 * 2**20, max(32 * 2**20, needed)))

    out = pl.pallas_call(
        aff_kernel,
        out_shape=jax.ShapeDtypeStruct((B, C, HW), io_dtype),
        grid_spec=pltpu.PrefetchScalarGridSpec(
            num_scalar_prefetch=0,
            grid=(B // bb,),
            in_specs=[
                pl.BlockSpec((bb, C, HW), lambda g: (g, 0, 0)),
                pl.BlockSpec((bb, C, HW), lambda g: (g, 0, 0)),
                pl.BlockSpec((ci, C), lambda g: (0, 0)),   # constant -> stays in VMEM
                pl.BlockSpec((C, ci), lambda g: (0, 0)),
                pl.BlockSpec((C, 4), lambda g: (0, 0)),
            ],
            out_specs=pl.BlockSpec((bb, C, HW), lambda g: (g, 0, 0)),
        ),
        compiler_params=pltpu.CompilerParams(
            dimension_semantics=("parallel",),
            vmem_limit_bytes=vmem_limit),
    )(x, r, w1l, w2l, vec_pack)

    return out.reshape(B, C, H, W)


def init_params(key, channels=64, r=4):
    ci = channels // r
    ks = jax.random.split(key, 8)

    def rnd(k, shape, scale):
        return (jax.random.normal(k, shape, jnp.float32) * scale).astype(jnp.float32)

    params = {
        # local branch (conv weights stored as (Cout, Cin), like squeezed Conv2d)
        "w1l": rnd(ks[0], (ci, channels), 0.1),
        "b1l": rnd(ks[1], (ci,), 0.05),
        "g1l": jnp.ones((ci,), jnp.float32),
        "be1l": jnp.zeros((ci,), jnp.float32),
        "w2l": rnd(ks[2], (channels, ci), 0.1),
        "b2l": rnd(ks[3], (channels,), 0.05),
        "g2l": jnp.ones((channels,), jnp.float32),
        "be2l": jnp.zeros((channels,), jnp.float32),
        # global branch (dead in the forward pass except be2g, kept for the reference)
        "w1g": rnd(ks[4], (ci, channels), 0.1),
        "b1g": rnd(ks[5], (ci,), 0.05),
        "g1g": jnp.ones((ci,), jnp.float32),
        "be1g": jnp.zeros((ci,), jnp.float32),
        "w2g": rnd(ks[6], (channels, ci), 0.1),
        "b2g": rnd(ks[7], (channels,), 0.05),
        "g2g": jnp.ones((channels,), jnp.float32),
        "be2g": rnd(ks[7], (channels,), 0.05),  # non-zero so the fold is actually tested
    }
    return params


# ------------------------ pure-JAX reference (NCHW) -------------------------
def _conv1x1(x, w, b):  # x: (B,C,H,W), w: (Cout,Cin)
    return jnp.einsum('bchw,dc->bdhw', x, w) + b.reshape(1, -1, 1, 1)


def _inorm_nchw(x, gamma, beta):
    mu = jnp.mean(x, axis=(2, 3), keepdims=True)
    var = jnp.mean((x - mu) ** 2, axis=(2, 3), keepdims=True)
    return (x - mu) * jax.lax.rsqrt(var + EPS) * gamma.reshape(1, -1, 1, 1) \
        + beta.reshape(1, -1, 1, 1)


def aff_reference(x, res, p):
    xa = x + res
    # local
    h = _conv1x1(xa, p["w1l"], p["b1l"])
    h = jnp.maximum(_inorm_nchw(h, p["g1l"], p["be1l"]), 0.0)
    h = _conv1x1(h, p["w2l"], p["b2l"])
    xl = _inorm_nchw(h, p["g2l"], p["be2l"])
    # global (computed in full; mathematically collapses to be2g)
    ga = jnp.mean(xa, axis=(2, 3), keepdims=True)
    g = _conv1x1(ga, p["w1g"], p["b1g"])
    g = jnp.maximum(_inorm_nchw(g, p["g1g"], p["be1g"]), 0.0)
    g = _conv1x1(g, p["w2g"], p["b2g"])
    xg = _inorm_nchw(g, p["g2g"], p["be2g"])
    wei = jax.nn.sigmoid(xl + xg)
    return 2.0 * x * wei + 2.0 * res * (1.0 - wei)


if __name__ == "__main__":
    key = jax.random.PRNGKey(0)
    kx, kr, kp, kx2, kr2 = jax.random.split(key, 5)

    # --- module-default shapes: channels=64, r=4; B=2 -> BB=1, grid=2 (v7x friendly)
    B, C, H, W = 2, 64, 16, 16
    x = jax.random.normal(kx, (B, C, H, W), jnp.float32)
    residual = jax.random.normal(kr, (B, C, H, W), jnp.float32)
    params = init_params(kp, channels=C, r=4)

    out = jax.block_until_ready(aff_forward(x, residual, params))
    ref = jax.block_until_ready(aff_reference(x, residual, params))
    assert out.shape == (B, C, H, W)
    assert jnp.allclose(out, ref, rtol=1e-4, atol=1e-4), "mismatch vs JAX reference (f32)"

    # --- BB-batched path: B=8 -> BB=4, grid=2 (two images per TC on v7x)
    B2 = 8
    x2 = jax.random.normal(kx2, (B2, C, H, W), jnp.float32)
    r2 = jax.random.normal(kr2, (B2, C, H, W), jnp.float32)
    out2 = jax.block_until_ready(aff_forward(x2, r2, params))
    ref2 = jax.block_until_ready(aff_reference(x2, r2, params))
    assert jnp.allclose(out2, ref2, rtol=1e-4, atol=1e-4), "mismatch vs JAX reference (BB>1)"

    # --- bf16 I/O + bf16 MXU operands (f32 accumulation / stats): loose check.
    out_bf16 = jax.block_until_ready(
        aff_forward(x, residual, params, io_dtype=jnp.bfloat16))
    assert out_bf16.shape == (B, C, H, W)
    assert out_bf16.dtype == jnp.bfloat16
    diff = float(jnp.max(jnp.abs(out_bf16.astype(jnp.float32) - ref)))
    assert jnp.isfinite(diff) and diff < 0.5, "bf16 path diverged"

    print("KERNEL_OK")
</pallas_src>

<mosaic_0001>
module attributes {stable_mosaic.version = 11 : i64} {
  func.func @aff_kernel(%arg0: i32, %arg1: memref<1x64x256xf32, #tpu.memory_space<vmem>>, %arg2: memref<1x64x256xf32, #tpu.memory_space<vmem>>, %arg3: memref<16x64xf32, #tpu.memory_space<vmem>>, %arg4: memref<64x16xf32, #tpu.memory_space<vmem>>, %arg5: memref<64x4xf32, #tpu.memory_space<vmem>>, %arg6: memref<1x64x256xf32, #tpu.memory_space<vmem>>) attributes {dimension_semantics = [#tpu.dimension_semantics<parallel>], iteration_bounds = array<i64: 2>, scalar_prefetch = 0 : i64, scratch_operands = 0 : i64, tpu.core_type = #tpu.core_type<tc>, window_params = [{transform_indices = @transform_0, window_bounds = array<i64: 1, 64, 256>}, {transform_indices = @transform_1, window_bounds = array<i64: 1, 64, 256>}, {pipeline_mode = #tpu.pipeline_mode<synchronous>, transform_indices = @transform_2, window_bounds = array<i64: 16, 64>}, {pipeline_mode = #tpu.pipeline_mode<synchronous>, transform_indices = @transform_3, window_bounds = array<i64: 64, 16>}, {pipeline_mode = #tpu.pipeline_mode<synchronous>, transform_indices = @transform_4, window_bounds = array<i64: 64, 4>}, {transform_indices = @transform_5, window_bounds = array<i64: 1, 64, 256>}]} {
    %c0 = arith.constant 0 : index
    %c0_0 = arith.constant 0 : index
    %0 = vector.load %arg5[%c0, %c0_0] : memref<64x4xf32, #tpu.memory_space<vmem>>, vector<64x4xf32>
    %1 = vector.extract_strided_slice %0 {offsets = [0, 0], sizes = [16, 1], strides = [1, 1]} : vector<64x4xf32> to vector<16x1xf32>
    %2 = vector.extract_strided_slice %0 {offsets = [0, 1], sizes = [16, 1], strides = [1, 1]} : vector<64x4xf32> to vector<16x1xf32>
    %3 = vector.extract_strided_slice %0 {offsets = [0, 2], sizes = [64, 1], strides = [1, 1]} : vector<64x4xf32> to vector<64x1xf32>
    %4 = vector.extract_strided_slice %0 {offsets = [0, 3], sizes = [64, 1], strides = [1, 1]} : vector<64x4xf32> to vector<64x1xf32>
    %c0_1 = arith.constant 0 : index
    %c0_2 = arith.constant 0 : index
    %5 = vector.load %arg3[%c0_1, %c0_2] : memref<16x64xf32, #tpu.memory_space<vmem>>, vector<16x64xf32>
    %c0_3 = arith.constant 0 : index
    %c0_4 = arith.constant 0 : index
    %6 = vector.load %arg4[%c0_3, %c0_4] : memref<64x16xf32, #tpu.memory_space<vmem>>, vector<64x16xf32>
    %c0_5 = arith.constant 0 : index
    %c0_6 = arith.constant 0 : index
    %c0_7 = arith.constant 0 : index
    %7 = vector.load %arg1[%c0_5, %c0_6, %c0_7] : memref<1x64x256xf32, #tpu.memory_space<vmem>>, vector<1x64x256xf32>
    %8 = vector.shape_cast %7 : vector<1x64x256xf32> to vector<64x256xf32>
    %c0_8 = arith.constant 0 : index
    %c0_9 = arith.constant 0 : index
    %c0_10 = arith.constant 0 : index
    %9 = vector.load %arg2[%c0_8, %c0_9, %c0_10] : memref<1x64x256xf32, #tpu.memory_space<vmem>>, vector<1x64x256xf32>
    %10 = vector.shape_cast %9 : vector<1x64x256xf32> to vector<64x256xf32>
    %11 = arith.addf %8, %10 : vector<64x256xf32>
    %cst = arith.constant dense<0.000000e+00> : vector<16x256xf32>
    %12 = tpu.matmul %5, %11, %cst {dimension_numbers = #tpu.dot_dimension_numbers<[1], [0], [0], [1], [0, 0, 1, 1], [], []>} : vector<16x64xf32>, vector<64x256xf32>, vector<16x256xf32> -> vector<16x256xf32>
    %cst_11 = arith.constant dense<0.000000e+00> : vector<16xf32>
    %13 = vector.multi_reduction <add>, %12, %cst_11 [1] : vector<16x256xf32> to vector<16xf32>
    %14 = vector.shape_cast %13 : vector<16xf32> to vector<16x1xf32>
    %15 = arith.mulf %12, %12 : vector<16x256xf32>
    %cst_12 = arith.constant dense<0.000000e+00> : vector<16xf32>
    %16 = vector.multi_reduction <add>, %15, %cst_12 [1] : vector<16x256xf32> to vector<16xf32>
    %17 = vector.shape_cast %16 : vector<16xf32> to vector<16x1xf32>
    %cst_13 = arith.constant 3.906250e-03 : f32
    %18 = vector.broadcast %cst_13 : f32 to vector<16x1xf32>
    %19 = arith.mulf %14, %18 : vector<16x1xf32>
    %cst_14 = arith.constant 3.906250e-03 : f32
    %20 = vector.broadcast %cst_14 : f32 to vector<16x1xf32>
    %21 = arith.mulf %17, %20 : vector<16x1xf32>
    %22 = arith.mulf %19, %19 : vector<16x1xf32>
    %23 = arith.subf %21, %22 : vector<16x1xf32>
    %cst_15 = arith.constant 0.000000e+00 : f32
    %24 = vector.broadcast %cst_15 : f32 to vector<16x1xf32>
    %25 = arith.maximumf %23, %24 : vector<16x1xf32>
    %26 = vector.broadcast %19 : vector<16x1xf32> to vector<16x256xf32>
    %27 = arith.subf %12, %26 : vector<16x256xf32>
    %cst_16 = arith.constant 9.99999974E-6 : f32
    %28 = vector.broadcast %cst_16 : f32 to vector<16x1xf32>
    %29 = arith.addf %25, %28 : vector<16x1xf32>
    %30 = math.rsqrt %29 : vector<16x1xf32>
    %31 = arith.mulf %30, %1 : vector<16x1xf32>
    %32 = vector.broadcast %31 : vector<16x1xf32> to vector<16x256xf32>
    %33 = arith.mulf %27, %32 : vector<16x256xf32>
    %34 = vector.broadcast %2 : vector<16x1xf32> to vector<16x256xf32>
    %35 = arith.addf %33, %34 : vector<16x256xf32>
    %cst_17 = arith.constant 0.000000e+00 : f32
    %36 = vector.broadcast %cst_17 : f32 to vector<16x256xf32>
    %37 = arith.maximumf %35, %36 : vector<16x256xf32>
    %cst_18 = arith.constant dense<0.000000e+00> : vector<64x256xf32>
    %38 = tpu.matmul %6, %37, %cst_18 {dimension_numbers = #tpu.dot_dimension_numbers<[1], [0], [0], [1], [0, 0, 1, 1], [], []>} : vector<64x16xf32>, vector<16x256xf32>, vector<64x256xf32> -> vector<64x256xf32>
    %cst_19 = arith.constant dense<0.000000e+00> : vector<64xf32>
    %39 = vector.multi_reduction <add>, %38, %cst_19 [1] : vector<64x256xf32> to vector<64xf32>
    %40 = vector.shape_cast %39 : vector<64xf32> to vector<64x1xf32>
    %41 = arith.mulf %38, %38 : vector<64x256xf32>
    %cst_20 = arith.constant dense<0.000000e+00> : vector<64xf32>
    %42 = vector.multi_reduction <add>, %41, %cst_20 [1] : vector<64x256xf32> to vector<64xf32>
    %43 = vector.shape_cast %42 : vector<64xf32> to vector<64x1xf32>
    %cst_21 = arith.constant 3.906250e-03 : f32
    %44 = vector.broadcast %cst_21 : f32 to vector<64x1xf32>
    %45 = arith.mulf %40, %44 : vector<64x1xf32>
    %cst_22 = arith.constant 3.906250e-03 : f32
    %46 = vector.broadcast %cst_22 : f32 to vector<64x1xf32>
    %47 = arith.mulf %43, %46 : vector<64x1xf32>
    %48 = arith.mulf %45, %45 : vector<64x1xf32>
    %49 = arith.subf %47, %48 : vector<64x1xf32>
    %cst_23 = arith.constant 0.000000e+00 : f32
    %50 = vector.broadcast %cst_23 : f32 to vector<64x1xf32>
    %51 = arith.maximumf %49, %50 : vector<64x1xf32>
    %52 = vector.broadcast %45 : vector<64x1xf32> to vector<64x256xf32>
    %53 = arith.subf %38, %52 : vector<64x256xf32>
    %cst_24 = arith.constant 9.99999974E-6 : f32
    %54 = vector.broadcast %cst_24 : f32 to vector<64x1xf32>
    %55 = arith.addf %51, %54 : vector<64x1xf32>
    %56 = math.rsqrt %55 : vector<64x1xf32>
    %57 = arith.mulf %56, %3 : vector<64x1xf32>
    %58 = vector.broadcast %57 : vector<64x1xf32> to vector<64x256xf32>
    %59 = arith.mulf %53, %58 : vector<64x256xf32>
    %60 = vector.broadcast %4 : vector<64x1xf32> to vector<64x256xf32>
    %61 = arith.addf %59, %60 : vector<64x256xf32>
    %62 = arith.negf %61 : vector<64x256xf32>
    %63 = math.exp %62 : vector<64x256xf32>
    %cst_25 = arith.constant 1.000000e+00 : f32
    %64 = vector.broadcast %cst_25 : f32 to vector<64x256xf32>
    %65 = arith.addf %64, %63 : vector<64x256xf32>
    %66 = arith.divf %64, %65 : vector<64x256xf32>
    %67 = arith.subf %8, %10 : vector<64x256xf32>
    %68 = arith.mulf %67, %66 : vector<64x256xf32>
    %69 = arith.addf %10, %68 : vector<64x256xf32>
    %cst_26 = arith.constant 2.000000e+00 : f32
    %70 = vector.broadcast %cst_26 : f32 to vector<64x256xf32>
    %71 = arith.mulf %70, %69 : vector<64x256xf32>
    %c0_27 = arith.constant 0 : index
    %c0_28 = arith.constant 0 : index
    %c0_29 = arith.constant 0 : index
    %72 = vector.load %arg6[%c0_27, %c0_28, %c0_29] : memref<1x64x256xf32, #tpu.memory_space<vmem>>, vector<1x64x256xf32>
    %73 = vector.shape_cast %72 : vector<1x64x256xf32> to vector<64x256xf32>
    %74 = vector.shape_cast %71 : vector<64x256xf32> to vector<1x64x256xf32>
    tpu.vector_store %arg6[%c0_27, %c0_28, %c0_29], %74 {strides = array<i32>} : memref<1x64x256xf32, #tpu.memory_space<vmem>>, vector<1x64x256xf32>,
    return
  }
  func.func @transform_0(%arg0: i32) -> (i32, i32, i32) {
    %c0_i32 = arith.constant 0 : i32
    %c0_i32_0 = arith.constant 0 : i32
    %c0_i32_1 = arith.constant 0 : i32
    return %arg0, %c0_i32, %c0_i32_0 : i32, i32, i32
  }
  func.func @transform_1(%arg0: i32) -> (i32, i32, i32) {
    %c0_i32 = arith.constant 0 : i32
    %c0_i32_0 = arith.constant 0 : i32
    %c0_i32_1 = arith.constant 0 : i32
    return %arg0, %c0_i32, %c0_i32_0 : i32, i32, i32
  }
  func.func @transform_2(%arg0: i32) -> (i32, i32) {
    %c0_i32 = arith.constant 0 : i32
    %c0_i32_0 = arith.constant 0 : i32
    %c0_i32_1 = arith.constant 0 : i32
    return %c0_i32, %c0_i32_0 : i32, i32
  }
  func.func @transform_3(%arg0: i32) -> (i32, i32) {
    %c0_i32 = arith.constant 0 : i32
    %c0_i32_0 = arith.constant 0 : i32
    %c0_i32_1 = arith.constant 0 : i32
    return %c0_i32, %c0_i32_0 : i32, i32
  }
  func.func @transform_4(%arg0: i32) -> (i32, i32) {
    %c0_i32 = arith.constant 0 : i32
    %c0_i32_0 = arith.constant 0 : i32
    %c0_i32_1 = arith.constant 0 : i32
    return %c0_i32, %c0_i32_0 : i32, i32
  }
  func.func @transform_5(%arg0: i32) -> (i32, i32, i32) {
    %c0_i32 = arith.constant 0 : i32
    %c0_i32_0 = arith.constant 0 : i32
    %c0_i32_1 = arith.constant 0 : i32
    return %arg0, %c0_i32, %c0_i32_0 : i32, i32, i32
  }
}

</mosaic_0001>

<llo_original>
// kernel: tpu_custom_call.1
$region0: #{tpu_custom_call.1}
  #allocation0 [shape = 'u32[]', space=smem, size = 0x4, offset = 0x4, fixed_abs, tag = 'smem constant byte address 0x4 - core index']
  #allocation1 [shape = 'u32[144,128]{1,0:T(1,128)}', space=vmem, size = 0x12000, scoped, tag = 'internal scratch']
  %s0 = inlined_call_operand.hbm [shape: f32[2,64,256], index: 0, kind: input, shape index: {}]
  %s1 = inlined_call_operand.hbm [shape: f32[2,64,256], index: 1, kind: input, shape index: {}]
  %s2 = inlined_call_operand.vmem [shape: f32[16,64], index: 2, kind: input, shape index: {}]
  %s3 = inlined_call_operand.vmem [shape: f32[64,16], index: 3, kind: input, shape index: {}]
  %s4 = inlined_call_operand.vmem [shape: f32[64,4], index: 4, kind: input, shape index: {}]
  %s5 = inlined_call_operand.hbm [shape: f32[2,64,256], index: 5, kind: output, shape index: {}]
  %s6 = sld [smem:[#allocation0]]
  $region61: #{tpu_custom_call.1} parent=0
    _
  %s8 = ssub.s32 1, %s6
  %s9 = scalar_select 0, %s8, %s6
  $region1: #{tpu_custom_call.1} parent=0
    #allocation2 [shape = 'u8[131072]{0}', space=vmem, size = 0x20000, scoped, tag = 'input window, operand 0']
    #allocation3 [shape = 's32[2]{0}', space=sflag, size = 0x8, scoped, tag = 'scoped memory for tpu_custom_call.1']
    #allocation4 [shape = 's32[2]{0}', space=sflag, size = 0x8, scoped, tag = 'scoped memory for tpu_custom_call.1']
    #allocation5 [shape = 'u8[131072]{0}', space=vmem, size = 0x20000, scoped, tag = 'input window, operand 1']
    #allocation6 [shape = 's32[2]{0}', space=sflag, size = 0x8, scoped, tag = 'scoped memory for tpu_custom_call.1']
    #allocation7 [shape = 'u8[131072]{0}', space=vmem, size = 0x20000, scoped, tag = 'output window, operand 0']
    %10 = vsyncpa [#allocation3], 0
    %s11 = scalar_lea.sflag [#allocation3], 1
    %12 = vsyncpa %s11, 0
    %13 = vsyncpa [#allocation6], 0
    %s14 = scalar_lea.sflag [#allocation6], 1
    %15 = vsyncpa %s14, 0
    %16 = vsyncpa [#allocation4], 0
    %s17 = scalar_lea.sflag [#allocation4], 1
    %18 = vsyncpa %s17, 0
    loop: start=0, step=1, limit=4
    $region2: #{tpu_custom_call.1} parent=1 // loop_pre_header
      _
    $region3: #{tpu_custom_call.1} parent=1 // loop_header
      %s20 = sphi 0, %s24
      %p21 = scmp.ge.s32.totalorder %s20, 4
      %s30 = sphi 0, %s32
      %s33 = sphi 0, %s30
      %s34 = sphi 0, %s33
      %s50 = sphi 0, %s34
      %s56 = sphi 0, %s58
      %s59 = sphi 0, %s56
      %s60 = sphi 0, %s59
      %s76 = sphi 0, %s60
      %s80 = sphi 0, %s80
      %s82 = sphi 0, %s80
      %s83 = sphi 0, %s82
      %s97 = sphi 0, %s83
      %s101 = sphi 0, %s101
      %s103 = sphi 0, %s101
      %s104 = sphi 0, %s103
      %s118 = sphi 0, %s104
      %s122 = sphi 0, %s122
      %s124 = sphi 0, %s122
      %s125 = sphi 0, %s124
      %s139 = sphi 0, %s125
      %s145 = sphi 0, %s147
      %s148 = sphi 0, %s145
      %s149 = sphi 0, %s148
      %s165 = sphi 0, %s149
    $region4: #{tpu_custom_call.1} parent=1 // loop_header_branch
      %23 = sbr.rel (%p21) target = $region8
    $region5: #{tpu_custom_call.1} parent=1 // loop_body
      %s25 = ssub.s32 %s20, 1
      %s26 = ssub.s32 %s20, 2
      %s27 = sadd.s32 %s20, 1
      %s28 = ssub.s32 %s20, %s27
      %p29 = scmp.eq.s32.totalorder %s28, 0
      %s31 = sadd.s32 %s30, 1
      %s32 = scalar_select %p29, %s30, %s31
      %p35 = pneg %p29
      %p36 = scmp.eq.s32.totalorder %s20, 1
      %p37 = por %p35, %p36
      %p38 = scmp.ne.s32.totalorder %s30, %s33
      %p39 = scmp.eq.s32.totalorder %s20, 0
      %p40 = por %p38, %p39
      %p41 = scmp.ne.s32.totalorder %s30, %s33
      %p42 = scmp.eq.s32.totalorder %s25, 1
      %p43 = por %p41, %p42
      %p44 = scmp.ne.s32.totalorder %s33, %s34
      %p45 = scmp.eq.s32.totalorder %s25, 0
      %p46 = por %p44, %p45
      %p47 = scmp.ne.s32.totalorder %s33, %s34
      %p48 = scmp.eq.s32.totalorder %s26, 1
      %p49 = por %p47, %p48
      %p51 = scmp.ne.s32.totalorder %s34, %s50
      %p52 = scmp.eq.s32.totalorder %s26, 0
      %p53 = por %p51, %p52
      %s54 = ssub.s32 %s20, %s27
      %p55 = scmp.eq.s32.totalorder %s54, 0
      %s57 = sadd.s32 %s56, 1
      %s58 = scalar_select %p55, %s56, %s57
      %p61 = pneg %p55
      %p62 = scmp.eq.s32.totalorder %s20, 1
      %p63 = por %p61, %p62
      %p64 = scmp.ne.s32.totalorder %s56, %s59
      %p65 = scmp.eq.s32.totalorder %s20, 0
      %p66 = por %p64, %p65
      %p67 = scmp.ne.s32.totalorder %s56, %s59
      %p68 = scmp.eq.s32.totalorder %s25, 1
      %p69 = por %p67, %p68
      %p70 = scmp.ne.s32.totalorder %s59, %s60
      %p71 = scmp.eq.s32.totalorder %s25, 0
      %p72 = por %p70, %p71
      %p73 = scmp.ne.s32.totalorder %s59, %s60
      %p74 = scmp.eq.s32.totalorder %s26, 1
      %p75 = por %p73, %p74
      %p77 = scmp.ne.s32.totalorder %s60, %s76
      %p78 = scmp.eq.s32.totalorder %s26, 0
      %p79 = por %p77, %p78
      %s81 = sadd.s32 %s80, 1
      %p84 = scmp.eq.s32.totalorder %s20, 1
      %p85 = scmp.ne.s32.totalorder %s80, %s82
      %p86 = scmp.eq.s32.totalorder %s20, 0
      %p87 = por %p85, %p86
      %p88 = scmp.ne.s32.totalorder %s80, %s82
      %p89 = scmp.eq.s32.totalorder %s25, 1
      %p90 = por %p88, %p89
      %p91 = scmp.ne.s32.totalorder %s82, %s83
      %p92 = scmp.eq.s32.totalorder %s25, 0
      %p93 = por %p91, %p92
      %p94 = scmp.ne.s32.totalorder %s82, %s83
      %p95 = scmp.eq.s32.totalorder %s26, 1
      %p96 = por %p94, %p95
      %p98 = scmp.ne.s32.totalorder %s83, %s97
      %p99 = scmp.eq.s32.totalorder %s26, 0
      %p100 = por %p98, %p99
      %s102 = sadd.s32 %s101, 1
      %p105 = scmp.eq.s32.totalorder %s20, 1
      %p106 = scmp.ne.s32.totalorder %s101, %s103
      %p107 = scmp.eq.s32.totalorder %s20, 0
      %p108 = por %p106, %p107
      %p109 = scmp.ne.s32.totalorder %s101, %s103
      %p110 = scmp.eq.s32.totalorder %s25, 1
      %p111 = por %p109, %p110
      %p112 = scmp.ne.s32.totalorder %s103, %s104
      %p113 = scmp.eq.s32.totalorder %s25, 0
      %p114 = por %p112, %p113
      %p115 = scmp.ne.s32.totalorder %s103, %s104
      %p116 = scmp.eq.s32.totalorder %s26, 1
      %p117 = por %p115, %p116
      %p119 = scmp.ne.s32.totalorder %s104, %s118
      %p120 = scmp.eq.s32.totalorder %s26, 0
      %p121 = por %p119, %p120
      %s123 = sadd.s32 %s122, 1
      %p126 = scmp.eq.s32.totalorder %s20, 1
      %p127 = scmp.ne.s32.totalorder %s122, %s124
      %p128 = scmp.eq.s32.totalorder %s20, 0
      %p129 = por %p127, %p128
      %p130 = scmp.ne.s32.totalorder %s122, %s124
      %p131 = scmp.eq.s32.totalorder %s25, 1
      %p132 = por %p130, %p131
      %p133 = scmp.ne.s32.totalorder %s124, %s125
      %p134 = scmp.eq.s32.totalorder %s25, 0
      %p135 = por %p133, %p134
      %p136 = scmp.ne.s32.totalorder %s124, %s125
      %p137 = scmp.eq.s32.totalorder %s26, 1
      %p138 = por %p136, %p137
      %p140 = scmp.ne.s32.totalorder %s125, %s139
      %p141 = scmp.eq.s32.totalorder %s26, 0
      %p142 = por %p140, %p141
      %s143 = ssub.s32 %s20, %s27
      %p144 = scmp.eq.s32.totalorder %s143, 0
      %s146 = sadd.s32 %s145, 1
      %s147 = scalar_select %p144, %s145, %s146
      %p150 = pneg %p144
      %p151 = scmp.eq.s32.totalorder %s20, 1
      %p152 = por %p150, %p151
      %p153 = scmp.ne.s32.totalorder %s145, %s148
      %p154 = scmp.eq.s32.totalorder %s20, 0
      %p155 = por %p153, %p154
      %p156 = scmp.ne.s32.totalorder %s145, %s148
      %p157 = scmp.eq.s32.totalorder %s25, 1
      %p158 = por %p156, %p157
      %p159 = scmp.ne.s32.totalorder %s148, %s149
      %p160 = scmp.eq.s32.totalorder %s25, 0
      %p161 = por %p159, %p160
      %p162 = scmp.ne.s32.totalorder %s148, %s149
      %p163 = scmp.eq.s32.totalorder %s26, 1
      %p164 = por %p162, %p163
      %p166 = scmp.ne.s32.totalorder %s149, %s165
      %p167 = scmp.eq.s32.totalorder %s26, 0
      %p168 = por %p166, %p167
      %p169 = scmp.le.s32.totalorder 1, %s20
      %p170 = scmp.lt.s32.totalorder %s20, 3
      %p171 = pnand %p169, %p170
      %p172 = pneg %p171
      // Predicated region
      $region9: #{tpu_custom_call.1} parent=5 // pred_check
        _
      $region10: #{tpu_custom_call.1} parent=5 // pred_check_branch
        %174 = sbr.rel (%p171) target = $region12
      $region11: #{tpu_custom_call.1} parent=5 // pred_region
        %s175 = ssub.s32 %s20, 1
        // Predicated region
        $region13: #{tpu_custom_call.1} parent=11 // pred_check
          %p176 = pneg %p93
        $region14: #{tpu_custom_call.1} parent=11 // pred_check_branch
          %178 = sbr.rel (%p176) target = $region16
        $region15: #{tpu_custom_call.1} parent=11 // pred_region
          _
        $region16: #{tpu_custom_call.1} parent=11 // pred_fallthru
          _
        // Predicated region
        $region17: #{tpu_custom_call.1} parent=11 // pred_check
          %p179 = pneg %p114
        $region18: #{tpu_custom_call.1} parent=11 // pred_check_branch
          %181 = sbr.rel (%p179) target = $region20
        $region19: #{tpu_custom_call.1} parent=11 // pred_region
          _
        $region20: #{tpu_custom_call.1} parent=11 // pred_fallthru
          _
        // Predicated region
        $region21: #{tpu_custom_call.1} parent=11 // pred_check
          %p182 = pneg %p135
        $region22: #{tpu_custom_call.1} parent=11 // pred_check_branch
          %184 = sbr.rel (%p182) target = $region24
        $region23: #{tpu_custom_call.1} parent=11 // pred_region
          _
        $region24: #{tpu_custom_call.1} parent=11 // pred_fallthru
          _
      $region12: #{tpu_custom_call.1} parent=5 // pred_fallthru
        _
      %p185 = scmp.lt.s32.totalorder %s20, 2
      // Predicated region
      $region25: #{tpu_custom_call.1} parent=5 // pred_check
        %p186 = pneg %p185
      $region26: #{tpu_custom_call.1} parent=5 // pred_check_branch
        %188 = sbr.rel (%p186) target = $region28
      $region27: #{tpu_custom_call.1} parent=5 // pred_region
        // Predicated region
        $region29: #{tpu_custom_call.1} parent=27 // pred_check
          %p189 = pneg %p40
        $region30: #{tpu_custom_call.1} parent=27 // pred_check_branch
          %191 = sbr.rel (%p189) target = $region32
        $region31: #{tpu_custom_call.1} parent=27 // pred_region
          %s192 = sand.u32 %s30, 1
          %s193 = scalar_lea.sflag [#allocation3], %s192
          %s194 = sand.u32 %s30, 1
          %s195 = smul.addr %s194, 128
          %s196 = scalar_lea.vmem [#allocation2], %s195
          %s198 = ssub.s32 2048, 2048
          %199 = vsyncadd %s193, %s198
          %s200 = smul.addr %s20, 16
          %s201 = smul.addr %s200, 128
          %s202 = scalar_lea.hbm %s0, %s201
          %s203 = sshll.u32 %s196, 4
          %s204 = int_to_ptr.vmem [resolvable:$true] %s203
          %209 = dma.hbm_to_vmem [thread:$0]  %s202, 2048, %s204, %s193, 256, 256, 16
        $region32: #{tpu_custom_call.1} parent=27 // pred_fallthru
          _
        // Predicated region
        $region33: #{tpu_custom_call.1} parent=27 // pred_check
          %p210 = pneg %p66
        $region34: #{tpu_custom_call.1} parent=27 // pred_check_branch
          %212 = sbr.rel (%p210) target = $region36
        $region35: #{tpu_custom_call.1} parent=27 // pred_region
          %s213 = sand.u32 %s56, 1
          %s214 = scalar_lea.sflag [#allocation6], %s213
          %s215 = sand.u32 %s56, 1
          %s216 = smul.addr %s215, 128
          %s217 = scalar_lea.vmem [#allocation5], %s216
          %s219 = ssub.s32 2048, 2048
          %220 = vsyncadd %s214, %s219
          %s221 = smul.addr %s20, 16
          %s222 = smul.addr %s221, 128
          %s223 = scalar_lea.hbm %s1, %s222
          %s224 = sshll.u32 %s217, 4
          %s225 = int_to_ptr.vmem [resolvable:$true] %s224
          %230 = dma.hbm_to_vmem [thread:$0]  %s223, 2048, %s225, %s214, 256, 256, 16
        $region36: #{tpu_custom_call.1} parent=27 // pred_fallthru
          _
      $region28: #{tpu_custom_call.1} parent=5 // pred_fallthru
        _
      %p231 = scmp.le.s32.totalorder 1, %s20
      %p232 = scmp.lt.s32.totalorder %s20, 3
      %p233 = pnand %p231, %p232
      %p234 = pneg %p233
      // Predicated region
      $region37: #{tpu_custom_call.1} parent=5 // pred_check
        _
      $region38: #{tpu_custom_call.1} parent=5 // pred_check_branch
        %236 = sbr.rel (%p233) target = $region40
      $region39: #{tpu_custom_call.1} parent=5 // pred_region
        %s237 = ssub.s32 %s20, 1
        %s238 = sand.u32 %s33, 1
        %s239 = scalar_lea.sflag [#allocation3], %s238
        %s240 = sand.u32 %s33, 1
        %s241 = smul.addr %s240, 128
        %s242 = scalar_lea.vmem [#allocation2], %s241
        // Predicated region
        $region41: #{tpu_custom_call.1} parent=39 // pred_check
          %p243 = pneg %p46
        $region42: #{tpu_custom_call.1} parent=39 // pred_check_branch
          %245 = sbr.rel (%p243) target = $region44
        $region43: #{tpu_custom_call.1} parent=39 // pred_region
          %246 = dma.done %s239, 2048
        $region44: #{tpu_custom_call.1} parent=39 // pred_fallthru
          _
        %s247 = sand.u32 %s59, 1
        %s248 = scalar_lea.sflag [#allocation6], %s247
        %s249 = sand.u32 %s59, 1
        %s250 = smul.addr %s249, 128
        %s251 = scalar_lea.vmem [#allocation5], %s250
        // Predicated region
        $region45: #{tpu_custom_call.1} parent=39 // pred_check
          %p252 = pneg %p72
        $region46: #{tpu_custom_call.1} parent=39 // pred_check_branch
          %254 = sbr.rel (%p252) target = $region48
        $region47: #{tpu_custom_call.1} parent=39 // pred_region
          %255 = dma.done %s248, 2048
        $region48: #{tpu_custom_call.1} parent=39 // pred_fallthru
          _
        %s256 = sand.u32 %s33, 1
        %s257 = scalar_lea.sflag [#allocation3], %s256
        %s258 = sand.u32 %s33, 1
        %s259 = smul.addr %s258, 128
        %s260 = scalar_lea.vmem [#allocation2], %s259
        %p261 = pneg %p46
        %p262 = pneg %p43
        %s263 = sand.u32 %s59, 1
        %s264 = scalar_lea.sflag [#allocation6], %s263
        %s265 = sand.u32 %s59, 1
        %s266 = smul.addr %s265, 128
        %s267 = scalar_lea.vmem [#allocation5], %s266
        %p268 = pneg %p72
        %p269 = pneg %p69
        %p270 = pneg %p93
        %p271 = pneg %p90
        %p272 = pneg %p114
        %p273 = pneg %p111
        %p274 = pneg %p135
        %p275 = pneg %p132
        %p276 = pneg %p161
        %p277 = pneg %p158
        %s278 = sand.u32 %s148, 1
        %s279 = scalar_lea.sflag [#allocation4], %s278
        %s280 = sand.u32 %s148, 1
        %s281 = smul.addr %s280, 128
        %s282 = scalar_lea.vmem [#allocation7], %s281
        %v283 = vld [vmem:[%s4] sm:$0xff]
        %v284 = vld [vmem:[%s4 + $0x8] sm:$0xff]
        %v285 = vld [vmem:[%s4 + $0x10] sm:$0xff]
        %v286 = vld [vmem:[%s4 + $0x18] sm:$0xff]
        %v287 = vld [vmem:[%s4 + $0x20] sm:$0xff]
        %v288 = vld [vmem:[%s4 + $0x28] sm:$0xff]
        %v289 = vld [vmem:[%s4 + $0x30] sm:$0xff]
        %v290 = vld [vmem:[%s4 + $0x38] sm:$0xff]
        %v291 = vld [vmem:[%s2] sm:$0xff]
        %v292 = vld [vmem:[%s2 + $0x8] sm:$0xff]
        %v293 = vld [vmem:[%s3] sm:$0xff]
        %v294 = vld [vmem:[%s3 + $0x8] sm:$0xff]
        %v295 = vld [vmem:[%s3 + $0x10] sm:$0xff]
        %v296 = vld [vmem:[%s3 + $0x18] sm:$0xff]
        %v297 = vld [vmem:[%s3 + $0x20] sm:$0xff]
        %v298 = vld [vmem:[%s3 + $0x28] sm:$0xff]
        %v299 = vld [vmem:[%s3 + $0x30] sm:$0xff]
        %v300 = vld [vmem:[%s3 + $0x38] sm:$0xff]
        %v301 = vld [vmem:[%s242] sm:$0xff]
        %v302 = vld [vmem:[%s242 + $0x8] sm:$0xff]
        %v303 = vld [vmem:[%s242 + $0x10] sm:$0xff]
        %v304 = vld [vmem:[%s242 + $0x18] sm:$0xff]
        %v305 = vld [vmem:[%s242 + $0x20] sm:$0xff]
        %v306 = vld [vmem:[%s242 + $0x28] sm:$0xff]
        %v307 = vld [vmem:[%s242 + $0x30] sm:$0xff]
        %v308 = vld [vmem:[%s242 + $0x38] sm:$0xff]
        %v309 = vld [vmem:[%s242 + $0x40] sm:$0xff]
        %v310 = vld [vmem:[%s242 + $0x48] sm:$0xff]
        %v311 = vld [vmem:[%s242 + $0x50] sm:$0xff]
        %v312 = vld [vmem:[%s242 + $0x58] sm:$0xff]
        %v313 = vld [vmem:[%s242 + $0x60] sm:$0xff]
        %v314 = vld [vmem:[%s242 + $0x68] sm:$0xff]
        %v315 = vld [vmem:[%s242 + $0x70] sm:$0xff]
        %v316 = vld [vmem:[%s242 + $0x78] sm:$0xff]
        %v317 = vld [vmem:[%s251] sm:$0xff]
        %v318 = vld [vmem:[%s251 + $0x8] sm:$0xff]
        %v319 = vld [vmem:[%s251 + $0x10] sm:$0xff]
        %v320 = vld [vmem:[%s251 + $0x18] sm:$0xff]
        %v321 = vld [vmem:[%s251 + $0x20] sm:$0xff]
        %v322 = vld [vmem:[%s251 + $0x28] sm:$0xff]
        %v323 = vld [vmem:[%s251 + $0x30] sm:$0xff]
        %v324 = vld [vmem:[%s251 + $0x38] sm:$0xff]
        %v325 = vld [vmem:[%s251 + $0x40] sm:$0xff]
        %v326 = vld [vmem:[%s251 + $0x48] sm:$0xff]
        %v327 = vld [vmem:[%s251 + $0x50] sm:$0xff]
        %v328 = vld [vmem:[%s251 + $0x58] sm:$0xff]
        %v329 = vld [vmem:[%s251 + $0x60] sm:$0xff]
        %v330 = vld [vmem:[%s251 + $0x68] sm:$0xff]
        %v331 = vld [vmem:[%s251 + $0x70] sm:$0xff]
        %v332 = vld [vmem:[%s251 + $0x78] sm:$0xff]
        %v333 = vadd.f32 %v301, %v317
        %v334 = vadd.f32 %v302, %v318
        %v335 = vadd.f32 %v303, %v319
        %v336 = vadd.f32 %v304, %v320
        %v337 = vadd.f32 %v305, %v321
        %v338 = vadd.f32 %v306, %v322
        %v339 = vadd.f32 %v307, %v323
        %v340 = vadd.f32 %v308, %v324
        %v341 = vadd.f32 %v309, %v325
        %v342 = vadd.f32 %v310, %v326
        %v343 = vadd.f32 %v311, %v327
        %v344 = vadd.f32 %v312, %v328
        %v345 = vadd.f32 %v313, %v329
        %v346 = vadd.f32 %v314, %v330
        %v347 = vadd.f32 %v315, %v331
        %v348 = vadd.f32 %v316, %v332
        %vm349 = vcmask 523264
        %v351 = vsel %vm349, %v291, 0
        %v354 = vsel %vm349, %v292, 0
        %356 = vmatprep.subr.mxu0 0.0
        %357 = vmatpush1.msra.mxu0 0.0
        %358 = vmatprep.subr.mxu0 0.0
        %359 = vmatpush1.msra.mxu0 0.0
        %360 = vmatprep.subr.mxu0 0.0
        %361 = vmatpush1.msra.mxu0 0.0
        %362 = vmatprep.subr.mxu0 0.0
        %363 = vmatpush1.msra.mxu0 0.0
        %364 = vmatprep.subr.mxu0 0.0
        %365 = vmatpush1.msra.mxu0 0.0
        %366 = vmatprep.subr.mxu0 0.0
        %367 = vmatpush1.msra.mxu0 0.0
        %368 = vmatprep.subr.mxu0 0.0
        %369 = vmatpush1.msra.mxu0 0.0
        %370 = vmatprep.subr.mxu0 0.0
        %371 = vmatpush1.msra.mxu0 0.0
        %372 = vmatprep.subr.mxu0 %v348
        %373 = vmatpush1.msra.mxu0 %v347
        %374 = vmatprep.subr.mxu0 %v346
        %375 = vmatpush1.msra.mxu0 %v345
        %376 = vmatprep.subr.mxu0 %v344
        %377 = vmatpush1.msra.mxu0 %v343
        %378 = vmatprep.subr.mxu0 %v342
        %379 = vmatpush1.msra.mxu0 %v341
        %380 = vmatprep.subr.mxu0 %v340
        %381 = vmatpush1.msra.mxu0 %v339
        %382 = vmatprep.subr.mxu0 %v338
        %383 = vmatpush1.msra.mxu0 %v337
        %384 = vmatprep.subr.mxu0 %v336
        %385 = vmatpush1.msra.mxu0 %v335
        %386 = vmatprep.subr.mxu0 %v334
        %387 = vmatpush1.msra.mxu0 %v333
        %388 = vmatprep.subr.mxu0 0.0
        %389 = vmatpush2.msra.mxu0 0.0
        %390 = vmatprep.subr.mxu0 0.0
        %391 = vmatpush2.msra.mxu0 0.0
        %392 = vmatprep.subr.mxu0 0.0
        %393 = vmatpush2.msra.mxu0 0.0
        %394 = vmatprep.subr.mxu0 0.0
        %395 = vmatpush2.msra.mxu0 0.0
        %396 = vmatprep.subr.mxu0 0.0
        %397 = vmatpush2.msra.mxu0 0.0
        %398 = vmatprep.subr.mxu0 0.0
        %399 = vmatpush2.msra.mxu0 0.0
        %400 = vmatprep.subr.mxu0 0.0
        %401 = vmatpush2.msra.mxu0 0.0
        %402 = vmatprep.subr.mxu0 0.0
        %403 = vmatpush2.msra.mxu0 0.0
        %404 = vmatprep.subr.mxu0 0.0
        %405 = vmatpush2.msra.mxu0 0.0
        %406 = vmatprep.subr.mxu0 0.0
        %407 = vmatpush2.msra.mxu0 0.0
        %408 = vmatprep.subr.mxu0 0.0
        %409 = vmatpush2.msra.mxu0 0.0
        %410 = vmatprep.subr.mxu0 0.0
        %411 = vmatpush2.msra.mxu0 0.0
        %412 = vmatprep.subr.mxu0 0.0
        %413 = vmatpush2.msra.mxu0 0.0
        %414 = vmatprep.subr.mxu0 0.0
        %415 = vmatpush2.msra.mxu0 0.0
        %416 = vmatprep.subr.mxu0 0.0
        %417 = vmatpush2.msra.mxu0 0.0
        %418 = vmatprep.subr.mxu0 0.0
        %419 = vmatpush2.msra.mxu0 0.0
        %420 = vmatprep.mubr.f32.mxu0 0.0
        %421 = vmatmul.mubr.f32.gmra.mxu0 %v351
        %v422 = vpop.f32.mrf.mxu0
        %v423 = vadd.f32 0.0, %v422
        %v424 = vpop.f32.mrf.mxu0
        %v425 = vadd.f32 0.0, %v424
        %426 = vmatprep.mubr.f32.mxu0 0.0
        %427 = vmatmul.mubr.f32.gmra.mxu0 %v354
        %v428 = vpop.f32.mrf.mxu0
        %v429 = vadd.f32 0.0, %v428
        %v430 = vpop.f32.mrf.mxu0
        %v431 = vadd.f32 0.0, %v430
        %432 = vdwg.mxu0
        %v433 = vadd.f32 %v423, %v425
        %434 = vadd.xlane.f32.xlu0 %v433
        %v435 = vpop.xlane.xlu0 %434
        %v436 = vadd.f32 %v429, %v431
        %437 = vadd.xlane.f32.xlu0 %v436
        %v438 = vpop.xlane.xlu0 %437
        %v439 = vmul.f32 %v423, %v423
        %v440 = vmul.f32 %v425, %v425
        %v441 = vmul.f32 %v429, %v429
        %v442 = vmul.f32 %v431, %v431
        %v443 = vadd.f32 %v439, %v440
        %444 = vadd.xlane.f32.xlu0 %v443
        %v445 = vpop.xlane.xlu0 %444
        %v446 = vadd.f32 %v441, %v442
        %447 = vadd.xlane.f32.xlu0 %v446
        %v448 = vpop.xlane.xlu0 %447
        %v449 = vmul.f32 %v435, 0.00390625
        %v450 = vmul.f32 %v438, 0.00390625
        %v451 = vmul.f32 %v445, 0.00390625
        %v452 = vmul.f32 %v448, 0.00390625
        %v453 = vmul.f32 %v449, %v449
        %v454 = vmul.f32 %v450, %v450
        %v455 = vsub.f32 %v451, %v453
        %v456 = vsub.f32 %v452, %v454
        %v457 = vmax.f32 %v455, 0.0
        %v458 = vmax.f32 %v456, 0.0
        %v459 = vsub.f32 %v423, %v449
        %v460 = vsub.f32 %v425, %v449
        %v461 = vsub.f32 %v429, %v450
        %v462 = vsub.f32 %v431, %v450
        %v463 = vadd.f32 %v457, 1e-05
        %v464 = vadd.f32 %v458, 1e-05
        %v465 = vrsqrt.pop %v463
        %v466 = vrsqrt.pop %v464
        %v467 = vmul.f32 %v465, %v283
        %v468 = vmul.f32 %v466, %v284
        %470 = vset.pattern.permute.xlu0 0
        %471 = vperm.xlu0 %470, %v467
        %v472 = vpop.permute.xlu0 %471
        %475 = vset.pattern.permute.xlu0 0
        %476 = vperm.xlu0 %475, %v468
        %v477 = vpop.permute.xlu0 %476
        %v479 = vmul.f32 %v459, %v472
        %v480 = vmul.f32 %v460, %v472
        %v481 = vmul.f32 %v461, %v477
        %v482 = vmul.f32 %v462, %v477
        %484 = vset.pattern.permute.xlu0 1
        %485 = vperm.xlu0 %484, %v283
        %v486 = vpop.permute.xlu0 %485
        %489 = vset.pattern.permute.xlu0 1
        %490 = vperm.xlu0 %489, %v284
        %v491 = vpop.permute.xlu0 %490
        %v493 = vadd.f32 %v479, %v486
        %v494 = vadd.f32 %v480, %v486
        %v495 = vadd.f32 %v481, %v491
        %v496 = vadd.f32 %v482, %v491
        %v497 = vmax.f32 %v493, 0.0
        %v498 = vmax.f32 %v494, 0.0
        %v499 = vmax.f32 %v495, 0.0
        %v500 = vmax.f32 %v496, 0.0
        %vm501 = vcmask 130048
        %v503 = vsel %vm501, %v293, 0
        %v506 = vsel %vm501, %v294, 0
        %v509 = vsel %vm501, %v295, 0
        %v512 = vsel %vm501, %v296, 0
        %v515 = vsel %vm501, %v297, 0
        %v518 = vsel %vm501, %v298, 0
        %v521 = vsel %vm501, %v299, 0
        %v524 = vsel %vm501, %v300, 0
        %526 = vmatprep.subr.mxu0 0.0
        %527 = vmatpush1.msra.mxu0 0.0
        %528 = vmatprep.subr.mxu0 0.0
        %529 = vmatpush1.msra.mxu0 0.0
        %530 = vmatprep.subr.mxu0 0.0
        %531 = vmatpush1.msra.mxu0 0.0
        %532 = vmatprep.subr.mxu0 0.0
        %533 = vmatpush1.msra.mxu0 0.0
        %534 = vmatprep.subr.mxu0 0.0
        %535 = vmatpush1.msra.mxu0 0.0
        %536 = vmatprep.subr.mxu0 0.0
        %537 = vmatpush1.msra.mxu0 0.0
        %538 = vmatprep.subr.mxu0 0.0
        %539 = vmatpush1.msra.mxu0 0.0
        %540 = vmatprep.subr.mxu0 0.0
        %541 = vmatpush1.msra.mxu0 0.0
        %542 = vmatprep.subr.mxu0 0.0
        %543 = vmatpush1.msra.mxu0 0.0
        %544 = vmatprep.subr.mxu0 0.0
        %545 = vmatpush1.msra.mxu0 0.0
        %546 = vmatprep.subr.mxu0 0.0
        %547 = vmatpush1.msra.mxu0 0.0
        %548 = vmatprep.subr.mxu0 0.0
        %549 = vmatpush1.msra.mxu0 0.0
        %550 = vmatprep.subr.mxu0 0.0
        %551 = vmatpush1.msra.mxu0 0.0
        %552 = vmatprep.subr.mxu0 0.0
        %553 = vmatpush1.msra.mxu0 0.0
        %554 = vmatprep.subr.mxu0 %v500
        %555 = vmatpush1.msra.mxu0 %v499
        %556 = vmatprep.subr.mxu0 %v498
        %557 = vmatpush1.msra.mxu0 %v497
        %558 = vmatprep.subr.mxu0 0.0
        %559 = vmatpush2.msra.mxu0 0.0
        %560 = vmatprep.subr.mxu0 0.0
        %561 = vmatpush2.msra.mxu0 0.0
        %562 = vmatprep.subr.mxu0 0.0
        %563 = vmatpush2.msra.mxu0 0.0
        %564 = vmatprep.subr.mxu0 0.0
        %565 = vmatpush2.msra.mxu0 0.0
        %566 = vmatprep.subr.mxu0 0.0
        %567 = vmatpush2.msra.mxu0 0.0
        %568 = vmatprep.subr.mxu0 0.0
        %569 = vmatpush2.msra.mxu0 0.0
        %570 = vmatprep.subr.mxu0 0.0
        %571 = vmatpush2.msra.mxu0 0.0
        %572 = vmatprep.subr.mxu0 0.0
        %573 = vmatpush2.msra.mxu0 0.0
        %574 = vmatprep.subr.mxu0 0.0
        %575 = vmatpush2.msra.mxu0 0.0
        %576 = vmatprep.subr.mxu0 0.0
        %577 = vmatpush2.msra.mxu0 0.0
        %578 = vmatprep.subr.mxu0 0.0
        %579 = vmatpush2.msra.mxu0 0.0
        %580 = vmatprep.subr.mxu0 0.0
        %581 = vmatpush2.msra.mxu0 0.0
        %582 = vmatprep.subr.mxu0 0.0
        %583 = vmatpush2.msra.mxu0 0.0
        %584 = vmatprep.subr.mxu0 0.0
        %585 = vmatpush2.msra.mxu0 0.0
        %586 = vmatprep.subr.mxu0 0.0
        %587 = vmatpush2.msra.mxu0 0.0
        %588 = vmatprep.subr.mxu0 0.0
        %589 = vmatpush2.msra.mxu0 0.0
        %590 = vmatprep.mubr.f32.mxu0 0.0
        %591 = vmatmul.mubr.f32.gmra.mxu0 %v503
        %v592 = vpop.f32.mrf.mxu0
        %v593 = vadd.f32 0.0, %v592
        %v594 = vpop.f32.mrf.mxu0
        %v595 = vadd.f32 0.0, %v594
        %596 = vmatprep.mubr.f32.mxu0 0.0
        %597 = vmatmul.mubr.f32.gmra.mxu0 %v506
        %v598 = vpop.f32.mrf.mxu0
        %v599 = vadd.f32 0.0, %v598
        %v600 = vpop.f32.mrf.mxu0
        %v601 = vadd.f32 0.0, %v600
        %602 = vmatprep.mubr.f32.mxu0 0.0
        %603 = vmatmul.mubr.f32.gmra.mxu0 %v509
        %v604 = vpop.f32.mrf.mxu0
        %v605 = vadd.f32 0.0, %v604
        %v606 = vpop.f32.mrf.mxu0
        %v607 = vadd.f32 0.0, %v606
        %608 = vmatprep.mubr.f32.mxu0 0.0
        %609 = vmatmul.mubr.f32.gmra.mxu0 %v512
        %v610 = vpop.f32.mrf.mxu0
        %v611 = vadd.f32 0.0, %v610
        %v612 = vpop.f32.mrf.mxu0
        %v613 = vadd.f32 0.0, %v612
        %614 = vmatprep.mubr.f32.mxu0 0.0
        %615 = vmatmul.mubr.f32.gmra.mxu0 %v515
        %v616 = vpop.f32.mrf.mxu0
        %v617 = vadd.f32 0.0, %v616
        %v618 = vpop.f32.mrf.mxu0
        %v619 = vadd.f32 0.0, %v618
        %620 = vmatprep.mubr.f32.mxu0 0.0
        %621 = vmatmul.mubr.f32.gmra.mxu0 %v518
        %v622 = vpop.f32.mrf.mxu0
        %v623 = vadd.f32 0.0, %v622
        %v624 = vpop.f32.mrf.mxu0
        %v625 = vadd.f32 0.0, %v624
        %626 = vmatprep.mubr.f32.mxu0 0.0
        %627 = vmatmul.mubr.f32.gmra.mxu0 %v521
        %v628 = vpop.f32.mrf.mxu0
        %v629 = vadd.f32 0.0, %v628
        %v630 = vpop.f32.mrf.mxu0
        %v631 = vadd.f32 0.0, %v630
        %632 = vmatprep.mubr.f32.mxu0 0.0
        %633 = vmatmul.mubr.f32.gmra.mxu0 %v524
        %v634 = vpop.f32.mrf.mxu0
        %v635 = vadd.f32 0.0, %v634
        %v636 = vpop.f32.mrf.mxu0
        %v637 = vadd.f32 0.0, %v636
        %638 = vdwg.mxu0
        %v639 = vadd.f32 %v593, %v595
        %640 = vadd.xlane.f32.xlu0 %v639
        %v641 = vpop.xlane.xlu0 %640
        %v642 = vadd.f32 %v599, %v601
        %643 = vadd.xlane.f32.xlu0 %v642
        %v644 = vpop.xlane.xlu0 %643
        %v645 = vadd.f32 %v605, %v607
        %646 = vadd.xlane.f32.xlu0 %v645
        %v647 = vpop.xlane.xlu0 %646
        %v648 = vadd.f32 %v611, %v613
        %649 = vadd.xlane.f32.xlu0 %v648
        %v650 = vpop.xlane.xlu0 %649
        %v651 = vadd.f32 %v617, %v619
        %652 = vadd.xlane.f32.xlu0 %v651
        %v653 = vpop.xlane.xlu0 %652
        %v654 = vadd.f32 %v623, %v625
        %655 = vadd.xlane.f32.xlu0 %v654
        %v656 = vpop.xlane.xlu0 %655
        %v657 = vadd.f32 %v629, %v631
        %658 = vadd.xlane.f32.xlu0 %v657
        %v659 = vpop.xlane.xlu0 %658
        %v660 = vadd.f32 %v635, %v637
        %661 = vadd.xlane.f32.xlu0 %v660
        %v662 = vpop.xlane.xlu0 %661
        %v663 = vmul.f32 %v593, %v593
        %v664 = vmul.f32 %v595, %v595
        %v665 = vmul.f32 %v599, %v599
        %v666 = vmul.f32 %v601, %v601
        %v667 = vmul.f32 %v605, %v605
        %v668 = vmul.f32 %v607, %v607
        %v669 = vmul.f32 %v611, %v611
        %v670 = vmul.f32 %v613, %v613
        %v671 = vmul.f32 %v617, %v617
        %v672 = vmul.f32 %v619, %v619
        %v673 = vmul.f32 %v623, %v623
        %v674 = vmul.f32 %v625, %v625
        %v675 = vmul.f32 %v629, %v629
        %v676 = vmul.f32 %v631, %v631
        %v677 = vmul.f32 %v635, %v635
        %v678 = vmul.f32 %v637, %v637
        %v679 = vadd.f32 %v663, %v664
        %680 = vadd.xlane.f32.xlu0 %v679
        %v681 = vpop.xlane.xlu0 %680
        %v682 = vadd.f32 %v665, %v666
        %683 = vadd.xlane.f32.xlu0 %v682
        %v684 = vpop.xlane.xlu0 %683
        %v685 = vadd.f32 %v667, %v668
        %686 = vadd.xlane.f32.xlu0 %v685
        %v687 = vpop.xlane.xlu0 %686
        %v688 = vadd.f32 %v669, %v670
        %689 = vadd.xlane.f32.xlu0 %v688
        %v690 = vpop.xlane.xlu0 %689
        %v691 = vadd.f32 %v671, %v672
        %692 = vadd.xlane.f32.xlu0 %v691
        %v693 = vpop.xlane.xlu0 %692
        %v694 = vadd.f32 %v673, %v674
        %695 = vadd.xlane.f32.xlu0 %v694
        %v696 = vpop.xlane.xlu0 %695
        %v697 = vadd.f32 %v675, %v676
        %698 = vadd.xlane.f32.xlu0 %v697
        %v699 = vpop.xlane.xlu0 %698
        %v700 = vadd.f32 %v677, %v678
        %701 = vadd.xlane.f32.xlu0 %v700
        %v702 = vpop.xlane.xlu0 %701
        %v703 = vmul.f32 %v641, 0.00390625
        %v704 = vmul.f32 %v644, 0.00390625
        %v705 = vmul.f32 %v647, 0.00390625
        %v706 = vmul.f32 %v650, 0.00390625
        %v707 = vmul.f32 %v653, 0.00390625
        %v708 = vmul.f32 %v656, 0.00390625
        %v709 = vmul.f32 %v659, 0.00390625
        %v710 = vmul.f32 %v662, 0.00390625
        %v711 = vmul.f32 %v681, 0.00390625
        %v712 = vmul.f32 %v684, 0.00390625
        %v713 = vmul.f32 %v687, 0.00390625
        %v714 = vmul.f32 %v690, 0.00390625
        %v715 = vmul.f32 %v693, 0.00390625
        %v716 = vmul.f32 %v696, 0.00390625
        %v717 = vmul.f32 %v699, 0.00390625
        %v718 = vmul.f32 %v702, 0.00390625
        %v719 = vmul.f32 %v703, %v703
        %v720 = vmul.f32 %v704, %v704
        %v721 = vmul.f32 %v705, %v705
        %v722 = vmul.f32 %v706, %v706
        %v723 = vmul.f32 %v707, %v707
        %v724 = vmul.f32 %v708, %v708
        %v725 = vmul.f32 %v709, %v709
        %v726 = vmul.f32 %v710, %v710
        %v727 = vsub.f32 %v711, %v719
        %v728 = vsub.f32 %v712, %v720
        %v729 = vsub.f32 %v713, %v721
        %v730 = vsub.f32 %v714, %v722
        %v731 = vsub.f32 %v715, %v723
        %v732 = vsub.f32 %v716, %v724
        %v733 = vsub.f32 %v717, %v725
        %v734 = vsub.f32 %v718, %v726
        %v735 = vmax.f32 %v727, 0.0
        %v736 = vmax.f32 %v728, 0.0
        %v737 = vmax.f32 %v729, 0.0
        %v738 = vmax.f32 %v730, 0.0
        %v739 = vmax.f32 %v731, 0.0
        %v740 = vmax.f32 %v732, 0.0
        %v741 = vmax.f32 %v733, 0.0
        %v742 = vmax.f32 %v734, 0.0
        %v743 = vsub.f32 %v593, %v703
        %v744 = vsub.f32 %v595, %v703
        %v745 = vsub.f32 %v599, %v704
        %v746 = vsub.f32 %v601, %v704
        %v747 = vsub.f32 %v605, %v705
        %v748 = vsub.f32 %v607, %v705
        %v749 = vsub.f32 %v611, %v706
        %v750 = vsub.f32 %v613, %v706
        %v751 = vsub.f32 %v617, %v707
        %v752 = vsub.f32 %v619, %v707
        %v753 = vsub.f32 %v623, %v708
        %v754 = vsub.f32 %v625, %v708
        %v755 = vsub.f32 %v629, %v709
        %v756 = vsub.f32 %v631, %v709
        %v757 = vsub.f32 %v635, %v710
        %v758 = vsub.f32 %v637, %v710
        %v759 = vadd.f32 %v735, 1e-05
        %v760 = vadd.f32 %v736, 1e-05
        %v761 = vadd.f32 %v737, 1e-05
        %v762 = vadd.f32 %v738, 1e-05
        %v763 = vadd.f32 %v739, 1e-05
        %v764 = vadd.f32 %v740, 1e-05
        %v765 = vadd.f32 %v741, 1e-05
        %v766 = vadd.f32 %v742, 1e-05
        %v767 = vrsqrt.pop %v759
        %v768 = vrsqrt.pop %v760
        %v769 = vrsqrt.pop %v761
        %v770 = vrsqrt.pop %v762
        %v771 = vrsqrt.pop %v763
        %v772 = vrsqrt.pop %v764
        %v773 = vrsqrt.pop %v765
        %v774 = vrsqrt.pop %v766
        %v775 = vmul.f32 %v767, %v283
        %v776 = vmul.f32 %v768, %v284
        %v777 = vmul.f32 %v769, %v285
        %v778 = vmul.f32 %v770, %v286
        %v779 = vmul.f32 %v771, %v287
        %v780 = vmul.f32 %v772, %v288
        %v781 = vmul.f32 %v773, %v289
        %v782 = vmul.f32 %v774, %v290
        %784 = vset.pattern.permute.xlu0 2
        %785 = vperm.xlu0 %784, %v775
        %v786 = vpop.permute.xlu0 %785
        %789 = vset.pattern.permute.xlu0 2
        %790 = vperm.xlu0 %789, %v776
        %v791 = vpop.permute.xlu0 %790
        %794 = vset.pattern.permute.xlu0 2
        %795 = vperm.xlu0 %794, %v777
        %v796 = vpop.permute.xlu0 %795
        %799 = vset.pattern.permute.xlu0 2
        %800 = vperm.xlu0 %799, %v778
        %v801 = vpop.permute.xlu0 %800
        %804 = vset.pattern.permute.xlu0 2
        %805 = vperm.xlu0 %804, %v779
        %v806 = vpop.permute.xlu0 %805
        %809 = vset.pattern.permute.xlu0 2
        %810 = vperm.xlu0 %809, %v780
        %v811 = vpop.permute.xlu0 %810
        %814 = vset.pattern.permute.xlu0 2
        %815 = vperm.xlu0 %814, %v781
        %v816 = vpop.permute.xlu0 %815
        %819 = vset.pattern.permute.xlu0 2
        %820 = vperm.xlu0 %819, %v782
        %v821 = vpop.permute.xlu0 %820
        %v823 = vmul.f32 %v743, %v786
        %v824 = vmul.f32 %v744, %v786
        %v825 = vmul.f32 %v745, %v791
        %v826 = vmul.f32 %v746, %v791
        %v827 = vmul.f32 %v747, %v796
        %v828 = vmul.f32 %v748, %v796
        %v829 = vmul.f32 %v749, %v801
        %v830 = vmul.f32 %v750, %v801
        %v831 = vmul.f32 %v751, %v806
        %v832 = vmul.f32 %v752, %v806
        %v833 = vmul.f32 %v753, %v811
        %v834 = vmul.f32 %v754, %v811
        %v835 = vmul.f32 %v755, %v816
        %v836 = vmul.f32 %v756, %v816
        %v837 = vmul.f32 %v757, %v821
        %v838 = vmul.f32 %v758, %v821
        %839 = vset.pattern.permute.xlu0 3
        %840 = vperm.xlu0 %839, %v283
        %v841 = vpop.permute.xlu0 %840
        %843 = vset.pattern.permute.xlu0 3
        %844 = vperm.xlu0 %843, %v284
        %v845 = vpop.permute.xlu0 %844
        %848 = vset.pattern.permute.xlu0 3
        %849 = vperm.xlu0 %848, %v285
        %v850 = vpop.permute.xlu0 %849
        %853 = vset.pattern.permute.xlu0 3
        %854 = vperm.xlu0 %853, %v286
        %v855 = vpop.permute.xlu0 %854
        %858 = vset.pattern.permute.xlu0 3
        %859 = vperm.xlu0 %858, %v287
        %v860 = vpop.permute.xlu0 %859
        %863 = vset.pattern.permute.xlu0 3
        %864 = vperm.xlu0 %863, %v288
        %v865 = vpop.permute.xlu0 %864
        %868 = vset.pattern.permute.xlu0 3
        %869 = vperm.xlu0 %868, %v289
        %v870 = vpop.permute.xlu0 %869
        %873 = vset.pattern.permute.xlu0 3
        %874 = vperm.xlu0 %873, %v290
        %v875 = vpop.permute.xlu0 %874
        %v877 = vadd.f32 %v823, %v841
        %v878 = vadd.f32 %v824, %v841
        %v879 = vadd.f32 %v825, %v845
        %v880 = vadd.f32 %v826, %v845
        %v881 = vadd.f32 %v827, %v850
        %v882 = vadd.f32 %v828, %v850
        %v883 = vadd.f32 %v829, %v855
        %v884 = vadd.f32 %v830, %v855
        %v885 = vadd.f32 %v831, %v860
        %v886 = vadd.f32 %v832, %v860
        %v887 = vadd.f32 %v833, %v865
        %v888 = vadd.f32 %v834, %v865
        %v889 = vadd.f32 %v835, %v870
        %v890 = vadd.f32 %v836, %v870
        %v891 = vadd.f32 %v837, %v875
        %v892 = vadd.f32 %v838, %v875
        %v893 = vxor.u32 %v877, 2147483648
        %v894 = vxor.u32 %v878, 2147483648
        %v895 = vxor.u32 %v879, 2147483648
        %v896 = vxor.u32 %v880, 2147483648
        %v897 = vxor.u32 %v881, 2147483648
        %v898 = vxor.u32 %v882, 2147483648
        %v899 = vxor.u32 %v883, 2147483648
        %v900 = vxor.u32 %v884, 2147483648
        %v901 = vxor.u32 %v885, 2147483648
        %v902 = vxor.u32 %v886, 2147483648
        %v903 = vxor.u32 %v887, 2147483648
        %v904 = vxor.u32 %v888, 2147483648
        %v905 = vxor.u32 %v889, 2147483648
        %v906 = vxor.u32 %v890, 2147483648
        %v907 = vxor.u32 %v891, 2147483648
        %v908 = vxor.u32 %v892, 2147483648
        %v909 = vmul.f32 %v893, 1.442695
        %v910 = vpow.pop %v909
        %v911 = vmul.f32 %v894, 1.442695
        %v912 = vpow.pop %v911
        %v913 = vmul.f32 %v895, 1.442695
        %v914 = vpow.pop %v913
        %v915 = vmul.f32 %v896, 1.442695
        %v916 = vpow.pop %v915
        %v917 = vmul.f32 %v897, 1.442695
        %v918 = vpow.pop %v917
        %v919 = vmul.f32 %v898, 1.442695
        %v920 = vpow.pop %v919
        %v921 = vmul.f32 %v899, 1.442695
        %v922 = vpow.pop %v921
        %v923 = vmul.f32 %v900, 1.442695
        %v924 = vpow.pop %v923
        %v925 = vmul.f32 %v901, 1.442695
        %v926 = vpow.pop %v925
        %v927 = vmul.f32 %v902, 1.442695
        %v928 = vpow.pop %v927
        %v929 = vmul.f32 %v903, 1.442695
        %v930 = vpow.pop %v929
        %v931 = vmul.f32 %v904, 1.442695
        %v932 = vpow.pop %v931
        %v933 = vmul.f32 %v905, 1.442695
        %v934 = vpow.pop %v933
        %v935 = vmul.f32 %v906, 1.442695
        %v936 = vpow.pop %v935
        %v937 = vmul.f32 %v907, 1.442695
        %v938 = vpow.pop %v937
        %v939 = vmul.f32 %v908, 1.442695
        %v940 = vpow.pop %v939
        %v941 = vadd.f32 %v910, 1.0
        %v942 = vadd.f32 %v912, 1.0
        %v943 = vadd.f32 %v914, 1.0
        %v944 = vadd.f32 %v916, 1.0
        %v945 = vadd.f32 %v918, 1.0
        %v946 = vadd.f32 %v920, 1.0
        %v947 = vadd.f32 %v922, 1.0
        %v948 = vadd.f32 %v924, 1.0
        %v949 = vadd.f32 %v926, 1.0
        %v950 = vadd.f32 %v928, 1.0
        %v951 = vadd.f32 %v930, 1.0
        %v952 = vadd.f32 %v932, 1.0
        %v953 = vadd.f32 %v934, 1.0
        %v954 = vadd.f32 %v936, 1.0
        %v955 = vadd.f32 %v938, 1.0
        %v956 = vadd.f32 %v940, 1.0
        %v957 = vrcp.pop %v941
        %v958 = vmul.f32 1.0, %v957
        %v959 = vrcp.pop %v942
        %v960 = vmul.f32 1.0, %v959
        %v961 = vrcp.pop %v943
        %v962 = vmul.f32 1.0, %v961
        %v963 = vrcp.pop %v944
        %v964 = vmul.f32 1.0, %v963
        %v965 = vrcp.pop %v945
        %v966 = vmul.f32 1.0, %v965
        %v967 = vrcp.pop %v946
        %v968 = vmul.f32 1.0, %v967
        %v969 = vrcp.pop %v947
        %v970 = vmul.f32 1.0, %v969
        %v971 = vrcp.pop %v948
        %v972 = vmul.f32 1.0, %v971
        %v973 = vrcp.pop %v949
        %v974 = vmul.f32 1.0, %v973
        %v975 = vrcp.pop %v950
        %v976 = vmul.f32 1.0, %v975
        %v977 = vrcp.pop %v951
        %v978 = vmul.f32 1.0, %v977
        %v979 = vrcp.pop %v952
        %v980 = vmul.f32 1.0, %v979
        %v981 = vrcp.pop %v953
        %v982 = vmul.f32 1.0, %v981
        %v983 = vrcp.pop %v954
        %v984 = vmul.f32 1.0, %v983
        %v985 = vrcp.pop %v955
        %v986 = vmul.f32 1.0, %v985
        %v987 = vrcp.pop %v956
        %v988 = vmul.f32 1.0, %v987
        %v989 = vsub.f32 %v301, %v317
        %v990 = vsub.f32 %v302, %v318
        %v991 = vsub.f32 %v303, %v319
        %v992 = vsub.f32 %v304, %v320
        %v993 = vsub.f32 %v305, %v321
        %v994 = vsub.f32 %v306, %v322
        %v995 = vsub.f32 %v307, %v323
        %v996 = vsub.f32 %v308, %v324
        %v997 = vsub.f32 %v309, %v325
        %v998 = vsub.f32 %v310, %v326
        %v999 = vsub.f32 %v311, %v327
        %v1000 = vsub.f32 %v312, %v328
        %v1001 = vsub.f32 %v313, %v329
        %v1002 = vsub.f32 %v314, %v330
        %v1003 = vsub.f32 %v315, %v331
        %v1004 = vsub.f32 %v316, %v332
        %v1005 = vmul.f32 %v989, %v958
        %v1006 = vmul.f32 %v990, %v960
        %v1007 = vmul.f32 %v991, %v962
        %v1008 = vmul.f32 %v992, %v964
        %v1009 = vmul.f32 %v993, %v966
        %v1010 = vmul.f32 %v994, %v968
        %v1011 = vmul.f32 %v995, %v970
        %v1012 = vmul.f32 %v996, %v972
        %v1013 = vmul.f32 %v997, %v974
        %v1014 = vmul.f32 %v998, %v976
        %v1015 = vmul.f32 %v999, %v978
        %v1016 = vmul.f32 %v1000, %v980
        %v1017 = vmul.f32 %v1001, %v982
        %v1018 = vmul.f32 %v1002, %v984
        %v1019 = vmul.f32 %v1003, %v986
        %v1020 = vmul.f32 %v1004, %v988
        %v1021 = vadd.f32 %v317, %v1005
        %v1022 = vadd.f32 %v318, %v1006
        %v1023 = vadd.f32 %v319, %v1007
        %v1024 = vadd.f32 %v320, %v1008
        %v1025 = vadd.f32 %v321, %v1009
        %v1026 = vadd.f32 %v322, %v1010
        %v1027 = vadd.f32 %v323, %v1011
        %v1028 = vadd.f32 %v324, %v1012
        %v1029 = vadd.f32 %v325, %v1013
        %v1030 = vadd.f32 %v326, %v1014
        %v1031 = vadd.f32 %v327, %v1015
        %v1032 = vadd.f32 %v328, %v1016
        %v1033 = vadd.f32 %v329, %v1017
        %v1034 = vadd.f32 %v330, %v1018
        %v1035 = vadd.f32 %v331, %v1019
        %v1036 = vadd.f32 %v332, %v1020
        %v1037 = vmul.f32 %v1021, 2.0
        %v1038 = vmul.f32 %v1022, 2.0
        %v1039 = vmul.f32 %v1023, 2.0
        %v1040 = vmul.f32 %v1024, 2.0
        %v1041 = vmul.f32 %v1025, 2.0
        %v1042 = vmul.f32 %v1026, 2.0
        %v1043 = vmul.f32 %v1027, 2.0
        %v1044 = vmul.f32 %v1028, 2.0
        %v1045 = vmul.f32 %v1029, 2.0
        %v1046 = vmul.f32 %v1030, 2.0
        %v1047 = vmul.f32 %v1031, 2.0
        %v1048 = vmul.f32 %v1032, 2.0
        %v1049 = vmul.f32 %v1033, 2.0
        %v1050 = vmul.f32 %v1034, 2.0
        %v1051 = vmul.f32 %v1035, 2.0
        %v1052 = vmul.f32 %v1036, 2.0
        %1053 = vst [vmem:[%s282] sm:$0xff] %v1037
        %1054 = vst [vmem:[%s282 + $0x8] sm:$0xff] %v1038
        %1055 = vst [vmem:[%s282 + $0x10] sm:$0xff] %v1039
        %1056 = vst [vmem:[%s282 + $0x18] sm:$0xff] %v1040
        %1057 = vst [vmem:[%s282 + $0x20] sm:$0xff] %v1041
        %1058 = vst [vmem:[%s282 + $0x28] sm:$0xff] %v1042
        %1059 = vst [vmem:[%s282 + $0x30] sm:$0xff] %v1043
        %1060 = vst [vmem:[%s282 + $0x38] sm:$0xff] %v1044
        %1061 = vst [vmem:[%s282 + $0x40] sm:$0xff] %v1045
        %1062 = vst [vmem:[%s282 + $0x48] sm:$0xff] %v1046
        %1063 = vst [vmem:[%s282 + $0x50] sm:$0xff] %v1047
        %1064 = vst [vmem:[%s282 + $0x58] sm:$0xff] %v1048
        %1065 = vst [vmem:[%s282 + $0x60] sm:$0xff] %v1049
        %1066 = vst [vmem:[%s282 + $0x68] sm:$0xff] %v1050
        %1067 = vst [vmem:[%s282 + $0x70] sm:$0xff] %v1051
        %1068 = vst [vmem:[%s282 + $0x78] sm:$0xff] %v1052
        %s1069 = sand.u32 %s148, 1
        %s1070 = scalar_lea.sflag [#allocation4], %s1069
        %s1071 = sand.u32 %s148, 1
        %s1072 = smul.addr %s1071, 128
        %s1073 = scalar_lea.vmem [#allocation7], %s1072
        // Predicated region
        $region49: #{tpu_custom_call.1} parent=39 // pred_check
          %p1074 = pneg %p158
        $region50: #{tpu_custom_call.1} parent=39 // pred_check_branch
          %1076 = sbr.rel (%p1074) target = $region52
        $region51: #{tpu_custom_call.1} parent=39 // pred_region
          %s1078 = ssub.s32 2048, 2048
          %1079 = vsyncadd %s1070, %s1078
          %s1080 = smul.addr %s25, 16
          %s1081 = smul.addr %s1080, 128
          %s1082 = scalar_lea.hbm %s5, %s1081
          %s1083 = sshll.u32 %s1073, 4
          %s1084 = int_to_ptr.vmem [resolvable:$true] %s1083
          %1089 = dma.vmem_to_hbm [thread:$0]  %s1084, 2048, %s1082, %s1070, 256, 256, 16
        $region52: #{tpu_custom_call.1} parent=39 // pred_fallthru
          _
      $region40: #{tpu_custom_call.1} parent=5 // pred_fallthru
        _
      %p1090 = scmp.le.s32.totalorder 2, %s20
      // Predicated region
      $region53: #{tpu_custom_call.1} parent=5 // pred_check
        %p1091 = pneg %p1090
      $region54: #{tpu_custom_call.1} parent=5 // pred_check_branch
        %1093 = sbr.rel (%p1091) target = $region56
      $region55: #{tpu_custom_call.1} parent=5 // pred_region
        %s1094 = ssub.s32 %s20, 2
        // Predicated region
        $region57: #{tpu_custom_call.1} parent=55 // pred_check
          %p1095 = pneg %p164
        $region58: #{tpu_custom_call.1} parent=55 // pred_check_branch
          %1097 = sbr.rel (%p1095) target = $region60
        $region59: #{tpu_custom_call.1} parent=55 // pred_region
          %s1098 = sand.u32 %s149, 1
          %s1099 = scalar_lea.sflag [#allocation4], %s1098
          %s1100 = sand.u32 %s149, 1
          %s1101 = smul.addr %s1100, 128
          %s1102 = scalar_lea.vmem [#allocation7], %s1101
          %1103 = dma.done %s1099, 2048
        $region60: #{tpu_custom_call.1} parent=55 // pred_fallthru
          _
      $region56: #{tpu_custom_call.1} parent=5 // pred_fallthru
        _
    $region6: #{tpu_custom_call.1} parent=1 // loop_footer
      %s24 = sadd.s32 1, %s20
    $region7: #{tpu_custom_call.1} parent=1 // loop_footer_branch
      %19 = sbr.rel target = $region3
    $region8: #{tpu_custom_call.1} parent=1 // loop_exit
      _
    %1104 = vsyncpa [#allocation3], 1
    %s1105 = scalar_lea.sflag [#allocation3], 1
    %1106 = vsyncpa %s1105, 1
    %1107 = vsyncpa [#allocation6], 1
    %s1108 = scalar_lea.sflag [#allocation6], 1
    %1109 = vsyncpa %s1108, 1
    %1110 = vsyncpa [#allocation4], 1
    %s1111 = scalar_lea.sflag [#allocation4], 1
    %1112 = vsyncpa %s1111, 1

</llo_original>
